<compile_context>
chip_gen: v7x
topology: tpu7x:2x2x1
jax: 0.10.0
libtpu: 0.0.40
codegen_flags: <defaults>
</compile_context>

<pallas_src>
import jax
import jax.numpy as jnp
from jax.experimental import pallas as pl
from jax.experimental.pallas import tpu as pltpu


def _round_up(n, m):
    return ((n + m - 1) // m) * m


def politician_kernel(x_ref, w_ref, b_ref, seg_ref, o_ref):
    # x_ref  : [TB, PACK*M]    PACK original rows packed side-by-side on lanes
    # w_ref  : [PACK*M, PACK*A] block-diagonal copies of the Linear weight
    # b_ref  : [1, PACK*A]      tiled bias
    # seg_ref: [PACK*A, PACK*A] block-diagonal all-ones (segmented row sums)
    x = x_ref[...]
    w = w_ref[...]
    b = b_ref[...]
    seg = seg_ref[...]

    # Linear layer on the MXU, f32 accumulation.
    logits = jnp.dot(x, w, preferred_element_type=jnp.float32) + b

    # softmax(sigmoid(z)):  sigmoid(z) = 0.5*tanh(0.5*z) + 0.5, and softmax is
    # shift invariant, so the constant +0.5 is dropped (exact).  The argument
    # of exp is bounded in [-0.5, 0.5], so no max-subtraction is needed.
    e = jnp.exp(0.5 * jnp.tanh(0.5 * logits))

    # Per-arm-group (size A) sums, broadcast back to every lane of the group,
    # via a second MXU matmul against the block-diagonal all-ones matrix.
    denom = jnp.dot(e, seg, preferred_element_type=jnp.float32)

    # Exact division (approx reciprocal was not accurate enough for the
    # softmax-normalization tolerance).
    o_ref[...] = e / denom


def politician_forward(x, w, b, *, max_tile_rows=1024):
    """softmax(sigmoid(x @ w + b), axis=-1).

    x: [B, M] f32, w: [M, A] f32, b: [1, A] f32  ->  [B, A] f32.
    `max_tile_rows` is in *packed* rows (each packed row = 128//A original rows).
    """
    B, M = x.shape
    _, A = w.shape

    # Lane-dense packing factor.
    pack = 128 // A if (A < 128 and 128 % A == 0) else 1

    Bp = _round_up(B, pack)
    if Bp != B:
        # Tiny pad (< pack rows) only so the row-packing reshape is legal; the
        # padded rows are computed row-wise and sliced off at the end.
        x = jnp.pad(x, ((0, Bp - B), (0, 0)))

    Rp = Bp // pack          # packed rows
    K = pack * M             # packed feature dim (x lanes)
    N = pack * A             # packed arm dim (output lanes; 128 when A | 128)

    xp = x.reshape(Rp, K)
    eye = jnp.eye(pack, dtype=w.dtype)
    w_packed = jnp.kron(eye, w)                        # [K, N] block-diagonal
    b_packed = jnp.tile(b, (1, pack))                  # [1, N]
    seg = jnp.kron(eye, jnp.ones((A, A), w.dtype))     # [N, N] block-diag ones

    # Row tiling: big tiles amortize the ~0.35us/grid-step overhead.  A
    # [1024, 256] f32 x-block + [1024, 128] out-block double-buffered is ~3 MiB
    # -> safe on every generation (v7x 64 MiB VMEM included).  Keep >= 2 grid
    # steps when the batch allows so both v7x TensorCores get work.
    max_tile_rows = max(8, (max_tile_rows // 8) * 8)
    tb = min(max_tile_rows, _round_up(Rp, 8))
    if Rp >= 16:
        tb = min(tb, _round_up(pl.cdiv(Rp, 2), 8))
    if tb >= Rp:
        tb = Rp                                        # single full-extent block
    num_tiles = pl.cdiv(Rp, tb)                        # ragged last tile OK

    out_packed = pl.pallas_call(
        politician_kernel,
        out_shape=jax.ShapeDtypeStruct((Rp, N), jnp.float32),
        grid_spec=pltpu.PrefetchScalarGridSpec(
            num_scalar_prefetch=0,
            grid=(num_tiles,),
            in_specs=[
                pl.BlockSpec((tb, K), lambda i: (i, 0)),   # packed x rows, tiled
                pl.BlockSpec((K, N), lambda i: (0, 0)),    # packed weight, resident
                pl.BlockSpec((1, N), lambda i: (0, 0)),    # packed bias, resident
                pl.BlockSpec((N, N), lambda i: (0, 0)),    # segment-sum matrix
            ],
            out_specs=pl.BlockSpec((tb, N), lambda i: (i, 0)),
        ),
        compiler_params=pltpu.CompilerParams(
            dimension_semantics=("parallel",),  # batch split across v7x's 2 TCs
        ),
    )(xp, w_packed, b_packed, seg)

    return out_packed.reshape(Bp, A)[:B]


def make_params(key, n_metrics, n_arms):
    """Deterministic init mirroring torch.nn.Linear's uniform(-1/sqrt(in), 1/sqrt(in))."""
    kw, kb = jax.random.split(key)
    bound = 1.0 / jnp.sqrt(jnp.float32(n_metrics))
    # PyTorch stores weight as [n_arms, n_metrics]; keep the transposed
    # [n_metrics, n_arms] layout so the kernel computes x @ w directly.
    w = jax.random.uniform(kw, (n_metrics, n_arms), jnp.float32, -bound, bound)
    b = jax.random.uniform(kb, (1, n_arms), jnp.float32, -bound, bound)
    return w, b


def politician_reference(x, w, b):
    """Pure-JAX reference of the PyTorch forward: softmax(sigmoid(x @ w + b), axis=-1)."""
    s = jax.nn.sigmoid(x @ w + b)
    return jax.nn.softmax(s, axis=-1)


def _check(out, x, w, b):
    # Rows of a softmax sum to 1 (loose bound covers reduced-precision matmul
    # paths on some generations; with exact division the error is ~1e-6).
    row_sums = jnp.sum(out, axis=-1)
    assert bool(jnp.all(jnp.abs(row_sums - 1.0) < 5e-3))
    ref = politician_reference(x, w, b)
    assert bool(jnp.all(jnp.abs(out - ref) < 2e-3))


# TODO(synk): `backprop` (one-hot policy-gradient loss + RMSprop step) is a
# training routine with optimizer state; it is not translated to a Pallas
# forward kernel here.

if __name__ == "__main__":
    key = jax.random.PRNGKey(0)
    k_x, k_p, k_x2, k_x3 = jax.random.split(key, 4)

    n_metrics, n_arms = 32, 16
    w, b = make_params(k_p, n_metrics, n_arms)

    # Small canonical case.
    x = jax.random.normal(k_x, (8, n_metrics), jnp.float32)
    out = jax.block_until_ready(politician_forward(x, w, b))
    assert out.shape == (8, n_arms)
    _check(out, x, w, b)

    # Ragged batch (exercises the tiny row-packing pad + slice-off).
    x2 = jax.random.normal(k_x2, (37, n_metrics), jnp.float32)
    out2 = jax.block_until_ready(politician_forward(x2, w, b))
    assert out2.shape == (37, n_arms)
    _check(out2, x2, w, b)

    # Multi-step grid (exercises row tiling / pipelining path).
    x3 = jax.random.normal(k_x3, (256, n_metrics), jnp.float32)
    out3 = jax.block_until_ready(politician_forward(x3, w, b, max_tile_rows=8))
    assert out3.shape == (256, n_arms)
    _check(out3, x3, w, b)

    print("KERNEL_OK")
</pallas_src>

<mosaic_0001>
module attributes {stable_mosaic.version = 11 : i64} {
  func.func @politician_kernel(%arg0: i32, %arg1: memref<1x256xf32, #tpu.memory_space<vmem>>, %arg2: memref<256x128xf32, #tpu.memory_space<vmem>>, %arg3: memref<1x128xf32, #tpu.memory_space<vmem>>, %arg4: memref<128x128xf32, #tpu.memory_space<vmem>>, %arg5: memref<1x128xf32, #tpu.memory_space<vmem>>) attributes {dimension_semantics = [#tpu.dimension_semantics<parallel>], iteration_bounds = array<i64: 1>, scalar_prefetch = 0 : i64, scratch_operands = 0 : i64, tpu.core_type = #tpu.core_type<tc>, window_params = [{transform_indices = @transform_0, window_bounds = array<i64: 1, 256>}, {pipeline_mode = #tpu.pipeline_mode<synchronous>, transform_indices = @transform_1, window_bounds = array<i64: 256, 128>}, {pipeline_mode = #tpu.pipeline_mode<synchronous>, transform_indices = @transform_2, window_bounds = array<i64: 1, 128>}, {pipeline_mode = #tpu.pipeline_mode<synchronous>, transform_indices = @transform_3, window_bounds = array<i64: 128, 128>}, {transform_indices = @transform_4, window_bounds = array<i64: 1, 128>}]} {
    %c0 = arith.constant 0 : index
    %c0_0 = arith.constant 0 : index
    %0 = vector.load %arg1[%c0, %c0_0] : memref<1x256xf32, #tpu.memory_space<vmem>>, vector<1x256xf32>
    %c0_1 = arith.constant 0 : index
    %c0_2 = arith.constant 0 : index
    %1 = vector.load %arg2[%c0_1, %c0_2] : memref<256x128xf32, #tpu.memory_space<vmem>>, vector<256x128xf32>
    %c0_3 = arith.constant 0 : index
    %c0_4 = arith.constant 0 : index
    %2 = vector.load %arg3[%c0_3, %c0_4] : memref<1x128xf32, #tpu.memory_space<vmem>>, vector<1x128xf32>
    %c0_5 = arith.constant 0 : index
    %c0_6 = arith.constant 0 : index
    %3 = vector.load %arg4[%c0_5, %c0_6] : memref<128x128xf32, #tpu.memory_space<vmem>>, vector<128x128xf32>
    %cst = arith.constant dense<0.000000e+00> : vector<1x128xf32>
    %4 = tpu.matmul %0, %1, %cst {dimension_numbers = #tpu.dot_dimension_numbers<[1], [0], [0], [1], [0, 0, 1, 1], [], []>} : vector<1x256xf32>, vector<256x128xf32>, vector<1x128xf32> -> vector<1x128xf32>
    %5 = arith.addf %4, %2 : vector<1x128xf32>
    %cst_7 = arith.constant 5.000000e-01 : f32
    %6 = vector.broadcast %cst_7 : f32 to vector<1x128xf32>
    %7 = arith.mulf %6, %5 : vector<1x128xf32>
    %8 = math.tanh %7 : vector<1x128xf32>
    %cst_8 = arith.constant 5.000000e-01 : f32
    %9 = vector.broadcast %cst_8 : f32 to vector<1x128xf32>
    %10 = arith.mulf %9, %8 : vector<1x128xf32>
    %11 = math.exp %10 : vector<1x128xf32>
    %cst_9 = arith.constant dense<0.000000e+00> : vector<1x128xf32>
    %12 = tpu.matmul %11, %3, %cst_9 {dimension_numbers = #tpu.dot_dimension_numbers<[1], [0], [0], [1], [0, 0, 1, 1], [], []>} : vector<1x128xf32>, vector<128x128xf32>, vector<1x128xf32> -> vector<1x128xf32>
    %13 = arith.divf %11, %12 : vector<1x128xf32>
    %c0_10 = arith.constant 0 : index
    %c0_11 = arith.constant 0 : index
    %14 = vector.load %arg5[%c0_10, %c0_11] : memref<1x128xf32, #tpu.memory_space<vmem>>, vector<1x128xf32>
    tpu.vector_store %arg5[%c0_10, %c0_11], %13 {strides = array<i32>} : memref<1x128xf32, #tpu.memory_space<vmem>>, vector<1x128xf32>,
    return
  }
  func.func @transform_0(%arg0: i32) -> (i32, i32) {
    %c0_i32 = arith.constant 0 : i32
    %c0_i32_0 = arith.constant 0 : i32
    return %arg0, %c0_i32 : i32, i32
  }
  func.func @transform_1(%arg0: i32) -> (i32, i32) {
    %c0_i32 = arith.constant 0 : i32
    %c0_i32_0 = arith.constant 0 : i32
    %c0_i32_1 = arith.constant 0 : i32
    return %c0_i32, %c0_i32_0 : i32, i32
  }
  func.func @transform_2(%arg0: i32) -> (i32, i32) {
    %c0_i32 = arith.constant 0 : i32
    %c0_i32_0 = arith.constant 0 : i32
    %c0_i32_1 = arith.constant 0 : i32
    return %c0_i32, %c0_i32_0 : i32, i32
  }
  func.func @transform_3(%arg0: i32) -> (i32, i32) {
    %c0_i32 = arith.constant 0 : i32
    %c0_i32_0 = arith.constant 0 : i32
    %c0_i32_1 = arith.constant 0 : i32
    return %c0_i32, %c0_i32_0 : i32, i32
  }
  func.func @transform_4(%arg0: i32) -> (i32, i32) {
    %c0_i32 = arith.constant 0 : i32
    %c0_i32_0 = arith.constant 0 : i32
    return %arg0, %c0_i32 : i32, i32
  }
}

</mosaic_0001>

<llo_original>
// kernel: tpu_custom_call.1
$region0: #{tpu_custom_call.1}
  #allocation0 [shape = 'u32[]', space=smem, size = 0x4, offset = 0x4, fixed_abs, tag = 'smem constant byte address 0x4 - core index']
  #allocation1 [shape = 'u32[144,128]{1,0:T(1,128)}', space=vmem, size = 0x12000, scoped, tag = 'internal scratch']
  %s0 = inlined_call_operand.hbm [shape: f32[1,256], index: 0, kind: input, shape index: {}]
  %s1 = inlined_call_operand.hbm [shape: f32[256,128], index: 1, kind: input, shape index: {}]
  %s2 = inlined_call_operand.vmem [shape: f32[1,128], index: 2, kind: input, shape index: {}]
  %s3 = inlined_call_operand.hbm [shape: f32[128,128], index: 3, kind: input, shape index: {}]
  %s4 = inlined_call_operand.hbm [shape: f32[1,128], index: 4, kind: output, shape index: {}]
  %s5 = sld [smem:[#allocation0]]
  $region38: #{tpu_custom_call.1} parent=0
    _
  %s7 = ssub.s32 1, %s5
  %s8 = scalar_select 0, %s7, %s5
  $region1: #{tpu_custom_call.1} parent=0
    #allocation2 [shape = 'u8[1024]{0}', space=vmem, size = 0x400, scoped, tag = 'input window, operand 0, single buffered']
    #allocation3 [shape = 's32[1]{0}', space=sflag, size = 0x4, scoped, tag = 'scoped memory for tpu_custom_call.1']
    #allocation4 [shape = 's32[1]{0}', space=sflag, size = 0x4, scoped, tag = 'scoped memory for tpu_custom_call.1']
    #allocation5 [shape = 'u8[131072]{0}', space=vmem, size = 0x20000, scoped, tag = 'input window, operand 1, single buffered']
    #allocation6 [shape = 's32[1]{0}', space=sflag, size = 0x4, scoped, tag = 'scoped memory for tpu_custom_call.1']
    #allocation7 [shape = 'u8[65536]{0}', space=vmem, size = 0x10000, scoped, tag = 'input window, operand 3, single buffered']
    #allocation8 [shape = 'u8[512]{0}', space=vmem, size = 0x400, scoped, tag = 'output window, operand 0, single buffered']
    %9 = vsyncpa [#allocation3], 0
    %10 = vsyncpa [#allocation6], 0
    %11 = vsyncpa [#allocation4], 0
    // Predicated region
    $region2: #{tpu_custom_call.1} parent=1 // pred_check
      _
    $region3: #{tpu_custom_call.1} parent=1 // pred_check_branch
      %13 = sbr.rel (0) target = $region5
    $region4: #{tpu_custom_call.1} parent=1 // pred_region
      %s15 = ssub.s32 32, 32
      %16 = vsyncadd [#allocation3], %s15
      %s18 = sshll.u32 [#allocation2], 4
      %s19 = int_to_ptr.vmem [resolvable:$true] %s18
      %21 = dma.hbm_to_vmem [thread:$0]  %s0, 32, %s19, [#allocation3]
    $region5: #{tpu_custom_call.1} parent=1 // pred_fallthru
      _
    // Predicated region
    $region6: #{tpu_custom_call.1} parent=1 // pred_check
      _
    $region7: #{tpu_custom_call.1} parent=1 // pred_check_branch
      %23 = sbr.rel (0) target = $region9
    $region8: #{tpu_custom_call.1} parent=1 // pred_region
      %s25 = ssub.s32 4096, 4096
      %26 = vsyncadd [#allocation6], %s25
      %s27 = sshll.u32 [#allocation5], 4
      %s28 = int_to_ptr.vmem [resolvable:$true] %s27
      %33 = dma.hbm_to_vmem [thread:$0]  %s1, 4096, %s28, [#allocation6], 128, 128, 8
    $region9: #{tpu_custom_call.1} parent=1 // pred_fallthru
      _
    // Predicated region
    $region10: #{tpu_custom_call.1} parent=1 // pred_check
      _
    $region11: #{tpu_custom_call.1} parent=1 // pred_check_branch
      %35 = sbr.rel (0) target = $region13
    $region12: #{tpu_custom_call.1} parent=1 // pred_region
      _
    $region13: #{tpu_custom_call.1} parent=1 // pred_fallthru
      _
    // Predicated region
    $region14: #{tpu_custom_call.1} parent=1 // pred_check
      _
    $region15: #{tpu_custom_call.1} parent=1 // pred_check_branch
      %37 = sbr.rel (0) target = $region17
    $region16: #{tpu_custom_call.1} parent=1 // pred_region
      %s39 = ssub.s32 2048, 2048
      %40 = vsyncadd [#allocation6], %s39
      %s41 = sshll.u32 [#allocation7], 4
      %s42 = int_to_ptr.vmem [resolvable:$true] %s41
      %47 = dma.hbm_to_vmem [thread:$0]  %s3, 2048, %s42, [#allocation6], 128, 128, 8
    $region17: #{tpu_custom_call.1} parent=1 // pred_fallthru
      _
    // Predicated region
    $region18: #{tpu_custom_call.1} parent=1 // pred_check
      _
    $region19: #{tpu_custom_call.1} parent=1 // pred_check_branch
      %49 = sbr.rel (0) target = $region21
    $region20: #{tpu_custom_call.1} parent=1 // pred_region
      %50 = dma.done [#allocation3], 32
    $region21: #{tpu_custom_call.1} parent=1 // pred_fallthru
      _
    // Predicated region
    $region22: #{tpu_custom_call.1} parent=1 // pred_check
      _
    $region23: #{tpu_custom_call.1} parent=1 // pred_check_branch
      %52 = sbr.rel (0) target = $region25
    $region24: #{tpu_custom_call.1} parent=1 // pred_region
      %53 = dma.done [#allocation6], 4096
    $region25: #{tpu_custom_call.1} parent=1 // pred_fallthru
      _
    // Predicated region
    $region26: #{tpu_custom_call.1} parent=1 // pred_check
      _
    $region27: #{tpu_custom_call.1} parent=1 // pred_check_branch
      %55 = sbr.rel (0) target = $region29
    $region28: #{tpu_custom_call.1} parent=1 // pred_region
      %56 = dma.done [#allocation6], 2048
    $region29: #{tpu_custom_call.1} parent=1 // pred_fallthru
      _
    %v57 = vld [vmem:[#allocation2] sm:$0x3]
    %v58 = vld [vmem:[#allocation5] sm:$0xff]
    %v59 = vld [vmem:[#allocation5 + $0x8] sm:$0xff]
    %v60 = vld [vmem:[#allocation5 + $0x10] sm:$0xff]
    %v61 = vld [vmem:[#allocation5 + $0x18] sm:$0xff]
    %v62 = vld [vmem:[#allocation5 + $0x20] sm:$0xff]
    %v63 = vld [vmem:[#allocation5 + $0x28] sm:$0xff]
    %v64 = vld [vmem:[#allocation5 + $0x30] sm:$0xff]
    %v65 = vld [vmem:[#allocation5 + $0x38] sm:$0xff]
    %v66 = vld [vmem:[#allocation5 + $0x40] sm:$0xff]
    %v67 = vld [vmem:[#allocation5 + $0x48] sm:$0xff]
    %v68 = vld [vmem:[#allocation5 + $0x50] sm:$0xff]
    %v69 = vld [vmem:[#allocation5 + $0x58] sm:$0xff]
    %v70 = vld [vmem:[#allocation5 + $0x60] sm:$0xff]
    %v71 = vld [vmem:[#allocation5 + $0x68] sm:$0xff]
    %v72 = vld [vmem:[#allocation5 + $0x70] sm:$0xff]
    %v73 = vld [vmem:[#allocation5 + $0x78] sm:$0xff]
    %v74 = vld [vmem:[#allocation5 + $0x80] sm:$0xff]
    %v75 = vld [vmem:[#allocation5 + $0x88] sm:$0xff]
    %v76 = vld [vmem:[#allocation5 + $0x90] sm:$0xff]
    %v77 = vld [vmem:[#allocation5 + $0x98] sm:$0xff]
    %v78 = vld [vmem:[#allocation5 + $0xa0] sm:$0xff]
    %v79 = vld [vmem:[#allocation5 + $0xa8] sm:$0xff]
    %v80 = vld [vmem:[#allocation5 + $0xb0] sm:$0xff]
    %v81 = vld [vmem:[#allocation5 + $0xb8] sm:$0xff]
    %v82 = vld [vmem:[#allocation5 + $0xc0] sm:$0xff]
    %v83 = vld [vmem:[#allocation5 + $0xc8] sm:$0xff]
    %v84 = vld [vmem:[#allocation5 + $0xd0] sm:$0xff]
    %v85 = vld [vmem:[#allocation5 + $0xd8] sm:$0xff]
    %v86 = vld [vmem:[#allocation5 + $0xe0] sm:$0xff]
    %v87 = vld [vmem:[#allocation5 + $0xe8] sm:$0xff]
    %v88 = vld [vmem:[#allocation5 + $0xf0] sm:$0xff]
    %v89 = vld [vmem:[#allocation5 + $0xf8] sm:$0xff]
    %v90 = vld [vmem:[%s2] sm:$0x1]
    %v91 = vld [vmem:[#allocation7] sm:$0xff]
    %v92 = vld [vmem:[#allocation7 + $0x8] sm:$0xff]
    %v93 = vld [vmem:[#allocation7 + $0x10] sm:$0xff]
    %v94 = vld [vmem:[#allocation7 + $0x18] sm:$0xff]
    %v95 = vld [vmem:[#allocation7 + $0x20] sm:$0xff]
    %v96 = vld [vmem:[#allocation7 + $0x28] sm:$0xff]
    %v97 = vld [vmem:[#allocation7 + $0x30] sm:$0xff]
    %v98 = vld [vmem:[#allocation7 + $0x38] sm:$0xff]
    %v99 = vld [vmem:[#allocation7 + $0x40] sm:$0xff]
    %v100 = vld [vmem:[#allocation7 + $0x48] sm:$0xff]
    %v101 = vld [vmem:[#allocation7 + $0x50] sm:$0xff]
    %v102 = vld [vmem:[#allocation7 + $0x58] sm:$0xff]
    %v103 = vld [vmem:[#allocation7 + $0x60] sm:$0xff]
    %v104 = vld [vmem:[#allocation7 + $0x68] sm:$0xff]
    %v105 = vld [vmem:[#allocation7 + $0x70] sm:$0xff]
    %v106 = vld [vmem:[#allocation7 + $0x78] sm:$0xff]
    %v108 = vlaneseq
    %v109 = vshrl.u32 %v108, 7
    %v110 = vsub.s32 0, %v109
    %v111 = vrot.slane %v57, %v110
    %v112 = vlaneseq
    %v113 = vshrl.u32 %v112, 7
    %v114 = vsub.s32 1, %v113
    %v115 = vrot.slane %v57, %v114
    %118 = vmatprep.subr.mxu0 0.0
    %119 = vmatpush1.msra.mxu0 %v58
    %120 = vmatprep.subr.mxu0 0.0
    %121 = vmatpush1.msra.mxu0 %v59
    %122 = vmatprep.subr.mxu0 0.0
    %123 = vmatpush1.msra.mxu0 %v60
    %124 = vmatprep.subr.mxu0 0.0
    %125 = vmatpush1.msra.mxu0 %v61
    %126 = vmatprep.subr.mxu0 0.0
    %127 = vmatpush1.msra.mxu0 %v62
    %128 = vmatprep.subr.mxu0 0.0
    %129 = vmatpush1.msra.mxu0 %v63
    %130 = vmatprep.subr.mxu0 0.0
    %131 = vmatpush1.msra.mxu0 %v64
    %132 = vmatprep.subr.mxu0 0.0
    %133 = vmatpush1.msra.mxu0 %v65
    %134 = vmatprep.subr.mxu0 0.0
    %135 = vmatpush1.msra.mxu0 %v66
    %136 = vmatprep.subr.mxu0 0.0
    %137 = vmatpush1.msra.mxu0 %v67
    %138 = vmatprep.subr.mxu0 0.0
    %139 = vmatpush1.msra.mxu0 %v68
    %140 = vmatprep.subr.mxu0 0.0
    %141 = vmatpush1.msra.mxu0 %v69
    %142 = vmatprep.subr.mxu0 0.0
    %143 = vmatpush1.msra.mxu0 %v70
    %144 = vmatprep.subr.mxu0 0.0
    %145 = vmatpush1.msra.mxu0 %v71
    %146 = vmatprep.subr.mxu0 0.0
    %147 = vmatpush1.msra.mxu0 %v72
    %148 = vmatprep.subr.mxu0 0.0
    %149 = vmatpush1.msra.mxu0 %v73
    %150 = vmatprep.subr.mxu0 0.0
    %151 = vmatpush1.msra.mxu0 %v74
    %152 = vmatprep.subr.mxu0 0.0
    %153 = vmatpush1.msra.mxu0 %v75
    %154 = vmatprep.subr.mxu0 0.0
    %155 = vmatpush1.msra.mxu0 %v76
    %156 = vmatprep.subr.mxu0 0.0
    %157 = vmatpush1.msra.mxu0 %v77
    %158 = vmatprep.subr.mxu0 0.0
    %159 = vmatpush1.msra.mxu0 %v78
    %160 = vmatprep.subr.mxu0 0.0
    %161 = vmatpush1.msra.mxu0 %v79
    %162 = vmatprep.subr.mxu0 0.0
    %163 = vmatpush1.msra.mxu0 %v80
    %164 = vmatprep.subr.mxu0 0.0
    %165 = vmatpush1.msra.mxu0 %v81
    %166 = vmatprep.subr.mxu0 0.0
    %167 = vmatpush1.msra.mxu0 %v82
    %168 = vmatprep.subr.mxu0 0.0
    %169 = vmatpush1.msra.mxu0 %v83
    %170 = vmatprep.subr.mxu0 0.0
    %171 = vmatpush1.msra.mxu0 %v84
    %172 = vmatprep.subr.mxu0 0.0
    %173 = vmatpush1.msra.mxu0 %v85
    %174 = vmatprep.subr.mxu0 0.0
    %175 = vmatpush1.msra.mxu0 %v86
    %176 = vmatprep.subr.mxu0 0.0
    %177 = vmatpush1.msra.mxu0 %v87
    %178 = vmatprep.subr.mxu0 0.0
    %179 = vmatpush1.msra.mxu0 %v88
    %180 = vmatprep.subr.mxu0 0.0
    %181 = vmatpush1.msra.mxu0 %v89
    %182 = vmatprep.mubr.f32.mxu0 %v115
    %183 = vmatmul.mubr.f32.gmra.mrb[0].mxu0 %v111
    %v184 = vpop.f32.mrb[0].mxu0
    %v185 = vadd.f32 %v90, %v184
    %v186 = vpop.f32.mrb[0].mxu0
    %187 = vdwg.mxu0
    %v188 = vmul.f32 %v185, 0.5
    %v189 = vtanh.pop %v188
    %v190 = vmul.f32 %v189, 0.5
    %v191 = vmul.f32 %v190, 1.442695
    %v192 = vpow.pop %v191
    %193 = vmatprep.subr.mxu0 0.0
    %194 = vmatpush1.msra.mxu0 %v91
    %195 = vmatprep.subr.mxu0 0.0
    %196 = vmatpush1.msra.mxu0 %v92
    %197 = vmatprep.subr.mxu0 0.0
    %198 = vmatpush1.msra.mxu0 %v93
    %199 = vmatprep.subr.mxu0 0.0
    %200 = vmatpush1.msra.mxu0 %v94
    %201 = vmatprep.subr.mxu0 0.0
    %202 = vmatpush1.msra.mxu0 %v95
    %203 = vmatprep.subr.mxu0 0.0
    %204 = vmatpush1.msra.mxu0 %v96
    %205 = vmatprep.subr.mxu0 0.0
    %206 = vmatpush1.msra.mxu0 %v97
    %207 = vmatprep.subr.mxu0 0.0
    %208 = vmatpush1.msra.mxu0 %v98
    %209 = vmatprep.subr.mxu0 0.0
    %210 = vmatpush1.msra.mxu0 %v99
    %211 = vmatprep.subr.mxu0 0.0
    %212 = vmatpush1.msra.mxu0 %v100
    %213 = vmatprep.subr.mxu0 0.0
    %214 = vmatpush1.msra.mxu0 %v101
    %215 = vmatprep.subr.mxu0 0.0
    %216 = vmatpush1.msra.mxu0 %v102
    %217 = vmatprep.subr.mxu0 0.0
    %218 = vmatpush1.msra.mxu0 %v103
    %219 = vmatprep.subr.mxu0 0.0
    %220 = vmatpush1.msra.mxu0 %v104
    %221 = vmatprep.subr.mxu0 0.0
    %222 = vmatpush1.msra.mxu0 %v105
    %223 = vmatprep.subr.mxu0 0.0
    %224 = vmatpush1.msra.mxu0 %v106
    %225 = vmatprep.subr.mxu0 0.0
    %226 = vmatpush1.msra.mxu0 0.0
    %227 = vmatprep.subr.mxu0 0.0
    %228 = vmatpush1.msra.mxu0 0.0
    %229 = vmatprep.subr.mxu0 0.0
    %230 = vmatpush1.msra.mxu0 0.0
    %231 = vmatprep.subr.mxu0 0.0
    %232 = vmatpush1.msra.mxu0 0.0
    %233 = vmatprep.subr.mxu0 0.0
    %234 = vmatpush1.msra.mxu0 0.0
    %235 = vmatprep.subr.mxu0 0.0
    %236 = vmatpush1.msra.mxu0 0.0
    %237 = vmatprep.subr.mxu0 0.0
    %238 = vmatpush1.msra.mxu0 0.0
    %239 = vmatprep.subr.mxu0 0.0
    %240 = vmatpush1.msra.mxu0 0.0
    %241 = vmatprep.subr.mxu0 0.0
    %242 = vmatpush1.msra.mxu0 0.0
    %243 = vmatprep.subr.mxu0 0.0
    %244 = vmatpush1.msra.mxu0 0.0
    %245 = vmatprep.subr.mxu0 0.0
    %246 = vmatpush1.msra.mxu0 0.0
    %247 = vmatprep.subr.mxu0 0.0
    %248 = vmatpush1.msra.mxu0 0.0
    %249 = vmatprep.subr.mxu0 0.0
    %250 = vmatpush1.msra.mxu0 0.0
    %251 = vmatprep.subr.mxu0 0.0
    %252 = vmatpush1.msra.mxu0 0.0
    %253 = vmatprep.subr.mxu0 0.0
    %254 = vmatpush1.msra.mxu0 0.0
    %255 = vmatprep.subr.mxu0 0.0
    %256 = vmatpush1.msra.mxu0 0.0
    %257 = vmatprep.mubr.f32.mxu0 0.0
    %258 = vmatmul.mubr.f32.gmra.mrb[0].mxu0 %v192
    %v259 = vpop.f32.mrb[0].mxu0
    %v260 = vadd.f32 0.0, %v259
    %v261 = vpop.f32.mrb[0].mxu0
    %262 = vdwg.mxu0
    %v263 = vrcp.pop %v260
    %v264 = vmul.f32 %v192, %v263
    %265 = vst [vmem:[#allocation8] sm:$0x1] %v264
    // Predicated region
    $region30: #{tpu_custom_call.1} parent=1 // pred_check
      _
    $region31: #{tpu_custom_call.1} parent=1 // pred_check_branch
      %267 = sbr.rel (0) target = $region33
    $region32: #{tpu_custom_call.1} parent=1 // pred_region
      %s269 = ssub.s32 16, 16
      %270 = vsyncadd [#allocation4], %s269
      %s272 = sshll.u32 [#allocation8], 4
      %s273 = int_to_ptr.vmem [resolvable:$true] %s272
      %275 = dma.vmem_to_hbm [thread:$0]  %s273, 16, %s4, [#allocation4]
    $region33: #{tpu_custom_call.1} parent=1 // pred_fallthru
      _
    // Predicated region
    $region34: #{tpu_custom_call.1} parent=1 // pred_check
      _
    $region35: #{tpu_custom_call.1} parent=1 // pred_check_branch
      %277 = sbr.rel (0) target = $region37
    $region36: #{tpu_custom_call.1} parent=1 // pred_region
      %278 = dma.done [#allocation4], 16
    $region37: #{tpu_custom_call.1} parent=1 // pred_fallthru
      _
    %279 = vsyncpa [#allocation3], 1
    %280 = vsyncpa [#allocation6], 1
    %281 = vsyncpa [#allocation4], 1

</llo_original>
